<compile_context>
chip_gen: v6e
topology: v6e:2x2x1
jax: 0.10.0
libtpu: 0.0.40
codegen_flags: <defaults>
</compile_context>

<pallas_src>
import functools
import math

import jax
import jax.numpy as jnp
from jax import lax
from jax.experimental import pallas as pl
from jax.experimental.pallas import tpu as pltpu


# --------------------------------------------------------------------------------------
# small helpers
# --------------------------------------------------------------------------------------
def _round_up(x, m):
    return ((x + m - 1) // m) * m


def _tile_bytes(shape, itemsize):
    """Rough padded-VMEM footprint of one block (sublane->8, lane->128 padding)."""
    lanes = _round_up(int(shape[-1]), 128)
    subl = _round_up(int(shape[-2]), 8) if len(shape) >= 2 else 1
    lead = 1
    for s in shape[:-2]:
        lead *= int(s)
    return lead * subl * lanes * itemsize


def _pick_seq_chunk(n, target):
    """Largest chunk <= target that divides n; prefer multiples of 128, then of 8."""
    target = max(1, min(target, n))
    best8 = None
    for t in range(target, 0, -1):
        if n % t:
            continue
        if t % 128 == 0:
            return t
        if best8 is None and t % 8 == 0:
            best8 = t
    return best8 if best8 is not None else n


# --------------------------------------------------------------------------------------
# Kernel 1: router pass.  grid = (batch, seq_chunk), both axes parallel.
# Emits per-token slab: [gates_k * routed_mask_k | raw_gates | logsumexp^2].
# --------------------------------------------------------------------------------------
def _router_kernel(
    x_ref,       # (1, tn, d)
    w_ref,       # (d, e)
    probs_ref,   # (1, tn, top_n)
    tle_ref,     # (e, e) bf16, inclusive upper-triangular (expert cumsum)
    out_ref,     # (1, tn, top_n*e + e + 1)
    *,
    top_n,
    num_gates,
    eps,
    thresholds,
):
    f32 = jnp.float32
    bf16 = jnp.bfloat16
    e = num_gates
    ke = top_n * e

    x = x_ref[0]                                                     # (tn, d)
    w = w_ref[...]                                                   # (d, e)
    t_le = tle_ref[...]                                              # (e, e) bf16 0/1

    # gate logits + softmax (f32)
    logits = jnp.dot(x, w, preferred_element_type=f32)               # (tn, e)
    m = jnp.max(logits, axis=-1, keepdims=True)
    ex = jnp.exp(logits - m)
    se = jnp.sum(ex, axis=-1, keepdims=True)
    raw_gates = ex / se                                              # (tn, e)
    lse = m + jnp.log(se)                                            # (tn, 1)

    # iterative top-n: max + first-occurrence one-hot (argmax-free, exact)
    oh_list, val_list = [], []
    g_work = raw_gates
    for _ in range(top_n):
        mx = jnp.max(g_work, axis=-1, keepdims=True)
        is_max = (g_work == mx).astype(f32)
        cs = jnp.dot(is_max.astype(bf16), t_le, preferred_element_type=f32)
        oh = is_max * (cs == 1.0).astype(f32)                        # first occurrence
        val = jnp.sum(raw_gates * oh, axis=-1, keepdims=True)        # (tn, 1)
        oh_list.append(oh)
        val_list.append(val)
        g_work = g_work - oh * 2.0

    denom = val_list[0]
    for k in range(1, top_n):
        denom = denom + val_list[k]
    denom = jnp.maximum(denom, eps)

    probs = probs_ref[0]                                             # (tn, top_n)

    # stochastic threshold routing; emit gates_k * routed_mask_k per level
    for k in range(top_n):
        gk = val_list[k] / denom                                     # (tn, 1)
        if k == 0:
            routed = oh_list[0]                                      # should_route[0]=True
        else:
            thr = max(float(thresholds[k]), eps)
            route = (probs[:, k:k + 1] < gk / thr).astype(f32)
            routed = oh_list[k] * route
        out_ref[0, :, k * e:(k + 1) * e] = gk * routed

    out_ref[0, :, ke:ke + e] = raw_gates                             # density proxy rows
    out_ref[0, :, ke + e:ke + e + 1] = lse * lse                     # router-z rows


# --------------------------------------------------------------------------------------
# Kernel 2: combine pass.  grid = (batch, seq_chunk), both axes parallel.
# Each combine chunk is written exactly once (no carried state: the per-chunk count
# prefixes and previous-level trimmed totals arrive precomputed in `base`).
# --------------------------------------------------------------------------------------
def _combine_kernel(
    sm_ref,      # (1, tn, W)  only lanes [0, top_n*e) are used
    base_ref,    # (1, nchunks, top_n*e)  exclusive chunk prefix + prev-level offset
    tri_ref,     # (tn, tn) bf16 strict lower triangular
    out_ref,     # (1, tn, e*cap_pad)  lane-dense flattened combine tensor
    *,
    top_n,
    num_gates,
    cap,
    cap_pad,
):
    f32 = jnp.float32
    bf16 = jnp.bfloat16
    e = num_gates
    ke = top_n * e
    ecap = e * cap_pad
    tn = out_ref.shape[1]

    c = pl.program_id(1)
    sm = sm_ref[0, :, 0:ke]                                          # (tn, ke) f32
    mask_b = (sm > 0.0).astype(bf16)                                 # 0/1 routed mask
    mask_f = mask_b.astype(f32)

    # all levels' exclusive sequence cumsum in ONE batched triangular matmul
    excl = jnp.dot(tri_ref[...], mask_b, preferred_element_type=f32)  # (tn, ke)
    base = base_ref[0, pl.ds(c, 1), :]                               # (1, ke)
    pie = (excl + base) * mask_f                                     # position in expert
    keep = mask_f * (pie < float(cap)).astype(f32)                   # capacity trim

    lane_iota = lax.broadcasted_iota(jnp.int32, (1, ecap), 1)
    e_iota = lax.broadcasted_iota(f32, (tn, e), 1)

    acc = None
    for k in range(top_n):
        sl = slice(k * e, (k + 1) * e)
        pie_k, keep_k, sm_k = pie[:, sl], keep[:, sl], sm[:, sl]
        coeff = jnp.sum(sm_k * keep_k, axis=-1, keepdims=True)       # gates_k * kept_flat
        pos = jnp.sum(pie_k, axis=-1, keepdims=True)                 # slot within expert
        eidx = jnp.sum(keep_k * e_iota, axis=-1, keepdims=True)      # expert index
        flat_idx = (eidx * float(cap_pad) + pos).astype(jnp.int32)   # (tn, 1)
        contrib = jnp.where(lane_iota == flat_idx, coeff, 0.0)       # fused one-hot*coeff
        acc = contrib if acc is None else acc + contrib
    out_ref[0] = acc                                                 # single store/chunk


# --------------------------------------------------------------------------------------
# Wrapper
# --------------------------------------------------------------------------------------
def top_n_gating(x, w, probs, *, num_gates, top_n, thresholds, eps=1e-9,
                 capacity_factor=1.25, min_expert_capacity=4, seq_chunk=256,
                 use_bf16_matmul=False):
    b, n, d = x.shape
    e = num_gates
    ke = top_n * e
    out_dtype = x.dtype
    assert probs.shape == (b, n, top_n)
    assert w.shape == (d, e)

    # expert capacity (matches the PyTorch module: int() truncation, then min clamp)
    cap = min(n, int(n * capacity_factor / num_gates))
    cap = max(cap, min_expert_capacity)
    # pad capacity so e*cap_pad is a multiple of 128 -> lane-dense combine stores
    step = 128 // math.gcd(e, 128)
    cap_pad = _round_up(cap, step)
    ecap = e * cap_pad
    slab_w = ke + e + 1

    if use_bf16_matmul:
        # TODO(synk): numerics-affecting (can flip routing on near-ties); off by default.
        x = x.astype(jnp.bfloat16)
        w = w.astype(jnp.bfloat16)
    xitem = jnp.dtype(x.dtype).itemsize

    # ---- sequence chunk: divides n, auto-shrunk until the combine chunk fits VMEM ----
    try:
        phys_vmem = int(pltpu.get_tpu_info().vmem_capacity_bytes)
    except Exception:
        phys_vmem = 64 << 20                                   # v7x has only 64 MiB
    budget = int(phys_vmem * 0.70)

    tn = _pick_seq_chunk(n, seq_chunk)
    while True:
        need2 = (2 * (_tile_bytes((tn, slab_w), 4)
                      + _tile_bytes((n // tn, ke), 4)
                      + _tile_bytes((tn, tn), 2)
                      + _tile_bytes((tn, ecap), 4))
                 + 2 * _tile_bytes((tn, ecap), 4))             # in-kernel temporaries
        if need2 <= budget or tn <= 8:
            break
        new_tn = _pick_seq_chunk(n, max(8, tn // 2))
        if new_tn >= tn:
            break
        tn = new_tn
    nchunks = n // tn

    need1 = 2 * (_tile_bytes((tn, d), xitem)
                 + _tile_bytes((d, e), xitem)
                 + _tile_bytes((tn, top_n), 4)
                 + _tile_bytes((e, e), 2)
                 + _tile_bytes((tn, slab_w), 4))
    limit1 = int(min(budget, max(need1 + (8 << 20), 32 << 20)))
    limit2 = int(min(budget, max(need2 + (8 << 20), 32 << 20)))

    # constant 0/1 triangular matrices (resident: fixed block index)
    t_le = (jnp.arange(e)[:, None] <= jnp.arange(e)[None, :]).astype(jnp.bfloat16)
    tri = (jnp.arange(tn)[None, :] < jnp.arange(tn)[:, None]).astype(jnp.bfloat16)

    # ---------------- pass 1: router ----------------
    router = functools.partial(
        _router_kernel, top_n=top_n, num_gates=e, eps=float(eps),
        thresholds=tuple(float(t) for t in thresholds))
    sm_ext = pl.pallas_call(
        router,
        out_shape=jax.ShapeDtypeStruct((b, n, slab_w), jnp.float32),
        grid_spec=pltpu.PrefetchScalarGridSpec(
            num_scalar_prefetch=0,
            grid=(b, nchunks),
            in_specs=[
                pl.BlockSpec((1, tn, d), lambda i, c: (i, c, 0)),
                pl.BlockSpec((d, e), lambda i, c: (0, 0)),
                pl.BlockSpec((1, tn, top_n), lambda i, c: (i, c, 0)),
                pl.BlockSpec((e, e), lambda i, c: (0, 0)),
            ],
            out_specs=pl.BlockSpec((1, tn, slab_w), lambda i, c: (i, c, 0)),
        ),
        compiler_params=pltpu.CompilerParams(
            dimension_semantics=("parallel", "parallel"),
            vmem_limit_bytes=limit1),
    )(x, w, probs, t_le)

    # ---------------- wrapper-side tiny reductions (counts, stats, capacity chain) ----
    sm = sm_ext[..., :ke]                                            # (b, n, ke)
    raw_gate_sum = jnp.sum(sm_ext[..., ke:ke + e], axis=1)           # (b, e)
    zsq_sum = jnp.sum(sm_ext[..., ke + e], axis=1)                   # (b,)

    routed = (sm > 0.0).astype(jnp.float32)
    counts_chunk = jnp.sum(routed.reshape(b, nchunks, tn, ke), axis=2)     # (b, nc, ke)
    carry = jnp.cumsum(counts_chunk, axis=1) - counts_chunk                # exclusive
    totals = jnp.sum(counts_chunk, axis=1).reshape(b, top_n, e)            # (b, k, e)

    cap_f = float(cap)
    prev = jnp.zeros((b, e), jnp.float32)
    prev_levels = [prev]
    trimmed0 = None
    for k in range(top_n):
        trimmed = jnp.minimum(totals[:, k, :], jnp.maximum(cap_f - prev, 0.0))
        if k == 0:
            trimmed0 = trimmed
        prev = trimmed
        if k < top_n - 1:
            prev_levels.append(trimmed)
    prev_flat = jnp.stack(prev_levels, axis=1).reshape(b, 1, ke)
    base = (carry + prev_flat).astype(jnp.float32)                   # (b, nchunks, ke)

    # ---------------- pass 2: combine ----------------
    combiner = functools.partial(
        _combine_kernel, top_n=top_n, num_gates=e, cap=cap, cap_pad=cap_pad)
    combine_flat = pl.pallas_call(
        combiner,
        out_shape=jax.ShapeDtypeStruct((b, n, ecap), jnp.float32),
        grid_spec=pltpu.PrefetchScalarGridSpec(
            num_scalar_prefetch=0,
            grid=(b, nchunks),
            in_specs=[
                pl.BlockSpec((1, tn, slab_w), lambda i, c: (i, c, 0)),
                pl.BlockSpec((1, nchunks, ke), lambda i, c: (i, 0, 0)),
                pl.BlockSpec((tn, tn), lambda i, c: (0, 0)),
            ],
            out_specs=pl.BlockSpec((1, tn, ecap), lambda i, c: (i, c, 0)),
        ),
        compiler_params=pltpu.CompilerParams(
            dimension_semantics=("parallel", "parallel"),
            vmem_limit_bytes=limit2),
    )(sm_ext, base, tri)

    combine = combine_flat.reshape(b, n, e, cap_pad)
    if cap_pad != cap:
        combine = combine[..., :cap]

    # dispatch = (combine != 0) fused here with the straight-through add
    dispatch = (combine != 0.0).astype(out_dtype)
    dispatch = dispatch + combine - lax.stop_gradient(combine)

    density_1 = trimmed0 / float(n)
    density_proxy = raw_gate_sum / float(n)
    balance_loss = jnp.mean(density_proxy * density_1) * float(num_gates ** 2)
    router_z_loss = jnp.sum(zsq_sum) / float(b * n)
    return dispatch, combine, balance_loss, router_z_loss


# --------------------------------------------------------------------------------------
# Pure-JAX reference (mirrors the PyTorch forward, training mode, noise off)
# --------------------------------------------------------------------------------------
def top_n_gating_reference(x, w, probs, *, num_gates, top_n, thresholds, eps,
                           expert_capacity):
    b, n, d = x.shape
    cap = expert_capacity
    logits = jnp.dot(x, w, precision=lax.Precision.HIGHEST)          # (b,n,e)
    raw_gates = jax.nn.softmax(logits, axis=-1)
    vals, idx = lax.top_k(raw_gates, top_n)                          # (b,n,k)
    gates = jnp.moveaxis(vals, -1, 0)                                # (k,b,n)
    gate_indices = jnp.moveaxis(idx, -1, 0)                          # (k,b,n)
    one_hot_idx = jax.nn.one_hot(gate_indices, num_gates, dtype=jnp.float32)
    mask = one_hot_idx
    denom = jnp.maximum(jnp.sum(gates, axis=0, keepdims=True), eps)
    gates = gates / denom
    thr = jnp.maximum(jnp.asarray(thresholds, jnp.float32), eps)[:, None, None]
    p = jnp.moveaxis(probs, -1, 0)                                   # (k,b,n)
    should_route = p < (gates / thr)
    should_route = should_route.at[0].set(True)
    mask = mask * should_route[..., None].astype(jnp.float32)
    mask_cumsum = jnp.cumsum(mask, axis=-2) - mask                   # exclusive over n
    prev = jnp.zeros((b, 1, num_gates), jnp.float32)
    positions, new_masks = [], []
    for k in range(top_n):
        pie = (mask_cumsum[k] + prev) * mask[k]
        mk = mask[k] * (pie < float(cap)).astype(jnp.float32)
        prev = jnp.sum(mk, axis=-2, keepdims=True)
        positions.append(jnp.sum(pie, axis=-1))
        new_masks.append(mk)
    mask = jnp.stack(new_masks)
    positions = jnp.stack(positions)
    mask_flat = jnp.sum(mask, axis=-1)
    gates = gates * mask_flat
    soh = jax.nn.one_hot(positions.astype(jnp.int32), cap, dtype=jnp.float32)
    combine = jnp.sum(
        gates[..., None, None] * mask_flat[..., None, None]
        * one_hot_idx[..., None] * soh[..., None, :], axis=0)        # (b,n,e,cap)
    dispatch = (combine != 0).astype(x.dtype)
    density_1 = jnp.mean(mask[0], axis=-2)
    density_proxy = jnp.mean(raw_gates, axis=-2)
    balance = jnp.mean(density_proxy * density_1) * float(num_gates ** 2)
    z = jnp.mean(jnp.square(jax.nn.logsumexp(logits, axis=-1)))
    return dispatch, combine, balance, z


if __name__ == "__main__":
    key = jax.random.PRNGKey(0)
    kx, kw, kp = jax.random.split(key, 3)

    b, n, d = 2, 8, 32
    num_gates, top_n = 4, 2
    eps = 1e-9
    thresholds = (eps, 0.2)          # == registered buffer threshold_train = [eps, 0.2]

    x = jax.random.normal(kx, (b, n, d), jnp.float32)
    # nn.Linear(dim, num_gates, bias=False) weight, stored transposed as (d, e)
    bound = 1.0 / (d ** 0.5)
    w = jax.random.uniform(kw, (d, num_gates), jnp.float32, minval=-bound, maxval=bound)
    # uniform(0,1) routing probabilities (explicit input instead of torch in-place RNG)
    probs = jax.random.uniform(kp, (b, n, top_n), jnp.float32)

    expert_capacity = max(min(n, int(n * 1.25 / num_gates)), 4)

    dispatch, combine, bal, zl = top_n_gating(
        x, w, probs, num_gates=num_gates, top_n=top_n,
        thresholds=thresholds, eps=eps,
        capacity_factor=1.25, min_expert_capacity=4)
    jax.block_until_ready((dispatch, combine, bal, zl))

    rd, rc, rb, rz = top_n_gating_reference(
        x, w, probs, num_gates=num_gates, top_n=top_n,
        thresholds=thresholds, eps=eps, expert_capacity=expert_capacity)

    assert combine.shape == (b, n, num_gates, expert_capacity)
    assert dispatch.shape == combine.shape
    assert jnp.allclose(combine, rc, rtol=1e-4, atol=1e-5), "combine mismatch"
    assert jnp.allclose(dispatch, rd, rtol=1e-4, atol=1e-5), "dispatch mismatch"
    assert jnp.allclose(bal, rb, rtol=1e-4, atol=1e-6), "balance_loss mismatch"
    assert jnp.allclose(zl, rz, rtol=1e-4, atol=1e-5), "router_z_loss mismatch"

    print("KERNEL_OK")
</pallas_src>

<mosaic_0001>
module attributes {stable_mosaic.version = 11 : i64} {
  func.func @_router_kernel(%arg0: i32, %arg1: i32, %arg2: memref<1x8x32xf32, #tpu.memory_space<vmem>>, %arg3: memref<32x4xf32, #tpu.memory_space<vmem>>, %arg4: memref<1x8x2xf32, #tpu.memory_space<vmem>>, %arg5: memref<4x4xbf16, #tpu.memory_space<vmem>>, %arg6: memref<1x8x13xf32, #tpu.memory_space<vmem>>) attributes {dimension_semantics = [#tpu.dimension_semantics<parallel>, #tpu.dimension_semantics<parallel>], iteration_bounds = array<i64: 2, 1>, scalar_prefetch = 0 : i64, scratch_operands = 0 : i64, tpu.core_type = #tpu.core_type<tc>, window_params = [{transform_indices = @transform_0, window_bounds = array<i64: 1, 8, 32>}, {pipeline_mode = #tpu.pipeline_mode<synchronous>, transform_indices = @transform_1, window_bounds = array<i64: 32, 4>}, {transform_indices = @transform_2, window_bounds = array<i64: 1, 8, 2>}, {pipeline_mode = #tpu.pipeline_mode<synchronous>, transform_indices = @transform_3, window_bounds = array<i64: 4, 4>}, {transform_indices = @transform_4, window_bounds = array<i64: 1, 8, 13>}]} {
    %c0 = arith.constant 0 : index
    %c0_0 = arith.constant 0 : index
    %c0_1 = arith.constant 0 : index
    %0 = vector.load %arg2[%c0, %c0_0, %c0_1] : memref<1x8x32xf32, #tpu.memory_space<vmem>>, vector<1x8x32xf32>
    %1 = vector.shape_cast %0 : vector<1x8x32xf32> to vector<8x32xf32>
    %c0_2 = arith.constant 0 : index
    %c0_3 = arith.constant 0 : index
    %2 = vector.load %arg3[%c0_2, %c0_3] : memref<32x4xf32, #tpu.memory_space<vmem>>, vector<32x4xf32>
    %c0_4 = arith.constant 0 : index
    %c0_5 = arith.constant 0 : index
    %3 = vector.load %arg5[%c0_4, %c0_5] : memref<4x4xbf16, #tpu.memory_space<vmem>>, vector<4x4xbf16>
    %cst = arith.constant dense<0.000000e+00> : vector<8x4xf32>
    %4 = tpu.matmul %1, %2, %cst {dimension_numbers = #tpu.dot_dimension_numbers<[1], [0], [0], [1], [0, 0, 1, 1], [], []>} : vector<8x32xf32>, vector<32x4xf32>, vector<8x4xf32> -> vector<8x4xf32>
    %cst_6 = arith.constant dense<0xFF800000> : vector<8xf32>
    %5 = vector.multi_reduction <maximumf>, %4, %cst_6 [1] : vector<8x4xf32> to vector<8xf32>
    %6 = vector.shape_cast %5 : vector<8xf32> to vector<8x1xf32>
    %7 = vector.broadcast %6 : vector<8x1xf32> to vector<8x4xf32>
    %8 = arith.subf %4, %7 : vector<8x4xf32>
    %9 = math.exp %8 : vector<8x4xf32>
    %cst_7 = arith.constant dense<0.000000e+00> : vector<8xf32>
    %10 = vector.multi_reduction <add>, %9, %cst_7 [1] : vector<8x4xf32> to vector<8xf32>
    %11 = vector.shape_cast %10 : vector<8xf32> to vector<8x1xf32>
    %12 = vector.broadcast %11 : vector<8x1xf32> to vector<8x4xf32>
    %13 = arith.divf %9, %12 : vector<8x4xf32>
    %14 = math.log %11 : vector<8x1xf32>
    %15 = arith.addf %6, %14 : vector<8x1xf32>
    %cst_8 = arith.constant dense<0xFF800000> : vector<8xf32>
    %16 = vector.multi_reduction <maximumf>, %13, %cst_8 [1] : vector<8x4xf32> to vector<8xf32>
    %17 = vector.shape_cast %16 : vector<8xf32> to vector<8x1xf32>
    %18 = vector.broadcast %17 : vector<8x1xf32> to vector<8x4xf32>
    %19 = arith.cmpf oeq, %13, %18 : vector<8x4xf32>
    %20 = arith.extui %19 : vector<8x4xi1> to vector<8x4xi32>
    %21 = arith.sitofp %20 : vector<8x4xi32> to vector<8x4xf32>
    %22 = arith.truncf %21 : vector<8x4xf32> to vector<8x4xbf16>
    %cst_9 = arith.constant dense<0.000000e+00> : vector<8x4xf32>
    %23 = tpu.matmul %22, %3, %cst_9 {dimension_numbers = #tpu.dot_dimension_numbers<[1], [0], [0], [1], [0, 0, 1, 1], [], []>} : vector<8x4xbf16>, vector<4x4xbf16>, vector<8x4xf32> -> vector<8x4xf32>
    %cst_10 = arith.constant 1.000000e+00 : f32
    %24 = vector.broadcast %cst_10 : f32 to vector<8x4xf32>
    %25 = arith.cmpf oeq, %23, %24 : vector<8x4xf32>
    %26 = arith.extui %25 : vector<8x4xi1> to vector<8x4xi32>
    %27 = arith.sitofp %26 : vector<8x4xi32> to vector<8x4xf32>
    %28 = arith.mulf %21, %27 : vector<8x4xf32>
    %29 = arith.mulf %13, %28 : vector<8x4xf32>
    %cst_11 = arith.constant dense<0.000000e+00> : vector<8xf32>
    %30 = vector.multi_reduction <add>, %29, %cst_11 [1] : vector<8x4xf32> to vector<8xf32>
    %31 = vector.shape_cast %30 : vector<8xf32> to vector<8x1xf32>
    %cst_12 = arith.constant 2.000000e+00 : f32
    %32 = vector.broadcast %cst_12 : f32 to vector<8x4xf32>
    %33 = arith.mulf %28, %32 : vector<8x4xf32>
    %34 = arith.subf %13, %33 : vector<8x4xf32>
    %cst_13 = arith.constant dense<0xFF800000> : vector<8xf32>
    %35 = vector.multi_reduction <maximumf>, %34, %cst_13 [1] : vector<8x4xf32> to vector<8xf32>
    %36 = vector.shape_cast %35 : vector<8xf32> to vector<8x1xf32>
    %37 = vector.broadcast %36 : vector<8x1xf32> to vector<8x4xf32>
    %38 = arith.cmpf oeq, %34, %37 : vector<8x4xf32>
    %39 = arith.extui %38 : vector<8x4xi1> to vector<8x4xi32>
    %40 = arith.sitofp %39 : vector<8x4xi32> to vector<8x4xf32>
    %41 = arith.truncf %40 : vector<8x4xf32> to vector<8x4xbf16>
    %cst_14 = arith.constant dense<0.000000e+00> : vector<8x4xf32>
    %42 = tpu.matmul %41, %3, %cst_14 {dimension_numbers = #tpu.dot_dimension_numbers<[1], [0], [0], [1], [0, 0, 1, 1], [], []>} : vector<8x4xbf16>, vector<4x4xbf16>, vector<8x4xf32> -> vector<8x4xf32>
    %cst_15 = arith.constant 1.000000e+00 : f32
    %43 = vector.broadcast %cst_15 : f32 to vector<8x4xf32>
    %44 = arith.cmpf oeq, %42, %43 : vector<8x4xf32>
    %45 = arith.extui %44 : vector<8x4xi1> to vector<8x4xi32>
    %46 = arith.sitofp %45 : vector<8x4xi32> to vector<8x4xf32>
    %47 = arith.mulf %40, %46 : vector<8x4xf32>
    %48 = arith.mulf %13, %47 : vector<8x4xf32>
    %cst_16 = arith.constant dense<0.000000e+00> : vector<8xf32>
    %49 = vector.multi_reduction <add>, %48, %cst_16 [1] : vector<8x4xf32> to vector<8xf32>
    %50 = vector.shape_cast %49 : vector<8xf32> to vector<8x1xf32>
    %51 = arith.addf %31, %50 : vector<8x1xf32>
    %cst_17 = arith.constant 9.99999971E-10 : f32
    %52 = vector.broadcast %cst_17 : f32 to vector<8x1xf32>
    %53 = arith.maximumf %51, %52 : vector<8x1xf32>
    %c0_18 = arith.constant 0 : index
    %c0_19 = arith.constant 0 : index
    %c0_20 = arith.constant 0 : index
    %54 = vector.load %arg4[%c0_18, %c0_19, %c0_20] : memref<1x8x2xf32, #tpu.memory_space<vmem>>, vector<1x8x2xf32>
    %55 = vector.shape_cast %54 : vector<1x8x2xf32> to vector<8x2xf32>
    %56 = arith.divf %31, %53 : vector<8x1xf32>
    %57 = vector.broadcast %56 : vector<8x1xf32> to vector<8x4xf32>
    %58 = arith.mulf %57, %28 : vector<8x4xf32>
    %c0_21 = arith.constant 0 : index
    %c0_22 = arith.constant 0 : index
    %c0_23 = arith.constant 0 : index
    %59 = vector.load %arg6[%c0_21, %c0_22, %c0_23] : memref<1x8x13xf32, #tpu.memory_space<vmem>>, vector<1x8x4xf32>
    %60 = vector.shape_cast %59 : vector<1x8x4xf32> to vector<8x4xf32>
    %61 = vector.shape_cast %58 : vector<8x4xf32> to vector<1x8x4xf32>
    tpu.vector_store %arg6[%c0_21, %c0_22, %c0_23], %61 {strides = array<i32>} : memref<1x8x13xf32, #tpu.memory_space<vmem>>, vector<1x8x4xf32>,
    %62 = arith.divf %50, %53 : vector<8x1xf32>
    %63 = vector.extract_strided_slice %55 {offsets = [0, 1], sizes = [8, 1], strides = [1, 1]} : vector<8x2xf32> to vector<8x1xf32>
    %cst_24 = arith.constant 2.000000e-01 : f32
    %64 = vector.broadcast %cst_24 : f32 to vector<8x1xf32>
    %65 = arith.divf %62, %64 : vector<8x1xf32>
    %66 = arith.cmpf olt, %63, %65 : vector<8x1xf32>
    %67 = arith.extui %66 : vector<8x1xi1> to vector<8x1xi32>
    %68 = arith.sitofp %67 : vector<8x1xi32> to vector<8x1xf32>
    %69 = vector.broadcast %68 : vector<8x1xf32> to vector<8x4xf32>
    %70 = arith.mulf %47, %69 : vector<8x4xf32>
    %71 = vector.broadcast %62 : vector<8x1xf32> to vector<8x4xf32>
    %72 = arith.mulf %71, %70 : vector<8x4xf32>
    %c0_25 = arith.constant 0 : index
    %c0_26 = arith.constant 0 : index
    %c4 = arith.constant 4 : index
    %73 = vector.load %arg6[%c0_25, %c0_26, %c4] : memref<1x8x13xf32, #tpu.memory_space<vmem>>, vector<1x8x4xf32>
    %74 = vector.shape_cast %73 : vector<1x8x4xf32> to vector<8x4xf32>
    %75 = vector.shape_cast %72 : vector<8x4xf32> to vector<1x8x4xf32>
    tpu.vector_store %arg6[%c0_25, %c0_26, %c4], %75 {strides = array<i32>} : memref<1x8x13xf32, #tpu.memory_space<vmem>>, vector<1x8x4xf32>,
    %c0_27 = arith.constant 0 : index
    %c0_28 = arith.constant 0 : index
    %c8 = arith.constant 8 : index
    %76 = vector.load %arg6[%c0_27, %c0_28, %c8] : memref<1x8x13xf32, #tpu.memory_space<vmem>>, vector<1x8x4xf32>
    %77 = vector.shape_cast %76 : vector<1x8x4xf32> to vector<8x4xf32>
    %78 = vector.shape_cast %13 : vector<8x4xf32> to vector<1x8x4xf32>
    tpu.vector_store %arg6[%c0_27, %c0_28, %c8], %78 {strides = array<i32>} : memref<1x8x13xf32, #tpu.memory_space<vmem>>, vector<1x8x4xf32>,
    %79 = arith.mulf %15, %15 : vector<8x1xf32>
    %c0_29 = arith.constant 0 : index
    %c0_30 = arith.constant 0 : index
    %c12 = arith.constant 12 : index
    %80 = vector.load %arg6[%c0_29, %c0_30, %c12] : memref<1x8x13xf32, #tpu.memory_space<vmem>>, vector<1x8x1xf32>
    %81 = vector.shape_cast %80 : vector<1x8x1xf32> to vector<8x1xf32>
    %82 = vector.shape_cast %79 : vector<8x1xf32> to vector<1x8x1xf32>
    tpu.vector_store %arg6[%c0_29, %c0_30, %c12], %82 {strides = array<i32>} : memref<1x8x13xf32, #tpu.memory_space<vmem>>, vector<1x8x1xf32>,
    return
  }
  func.func @transform_0(%arg0: i32, %arg1: i32) -> (i32, i32, i32) {
    %c0_i32 = arith.constant 0 : i32
    %c0_i32_0 = arith.constant 0 : i32
    return %arg0, %arg1, %c0_i32 : i32, i32, i32
  }
  func.func @transform_1(%arg0: i32, %arg1: i32) -> (i32, i32) {
    %c0_i32 = arith.constant 0 : i32
    %c0_i32_0 = arith.constant 0 : i32
    %c0_i32_1 = arith.constant 0 : i32
    return %c0_i32, %c0_i32_0 : i32, i32
  }
  func.func @transform_2(%arg0: i32, %arg1: i32) -> (i32, i32, i32) {
    %c0_i32 = arith.constant 0 : i32
    %c0_i32_0 = arith.constant 0 : i32
    return %arg0, %arg1, %c0_i32 : i32, i32, i32
  }
  func.func @transform_3(%arg0: i32, %arg1: i32) -> (i32, i32) {
    %c0_i32 = arith.constant 0 : i32
    %c0_i32_0 = arith.constant 0 : i32
    %c0_i32_1 = arith.constant 0 : i32
    return %c0_i32, %c0_i32_0 : i32, i32
  }
  func.func @transform_4(%arg0: i32, %arg1: i32) -> (i32, i32, i32) {
    %c0_i32 = arith.constant 0 : i32
    %c0_i32_0 = arith.constant 0 : i32
    return %arg0, %arg1, %c0_i32 : i32, i32, i32
  }
}

</mosaic_0001>

<llo_original>
// kernel: tpu_custom_call.1
$region0: #{tpu_custom_call.1}
  #allocation0 [shape = 'u32[]', space=smem, size = 0x4, offset = 0x4, fixed_abs, tag = 'smem constant byte address 0x4 - core index']
  #allocation1 [shape = 'u32[144,128]{1,0:T(1,128)}', space=vmem, size = 0x12000, scoped, tag = 'internal scratch']
  %s0 = inlined_call_operand.vmem [shape: f32[2,8,32], index: 0, kind: input, shape index: {}]
  %s1 = inlined_call_operand.vmem [shape: f32[32,4], index: 1, kind: input, shape index: {}]
  %s2 = inlined_call_operand.vmem [shape: f32[2,8,2], index: 2, kind: input, shape index: {}]
  %s3 = inlined_call_operand.vmem [shape: bf16[4,4], index: 3, kind: input, shape index: {}]
  %s4 = inlined_call_operand.hbm [shape: f32[2,8,13], index: 4, kind: output, shape index: {}]
  %s5 = sld [smem:[#allocation0]]
  $region49: #{tpu_custom_call.1} parent=0
    _
  %s7 = ssub.s32 1, %s5
  %s8 = scalar_select 0, %s7, %s5
  $region1: #{tpu_custom_call.1} parent=0
    #allocation2 [shape = 'u8[8192]{0}', space=vmem, size = 0x2000, scoped, tag = 'output window, operand 0']
    #allocation3 [shape = 's32[2]{0}', space=sflag, size = 0x8, scoped, tag = 'scoped memory for tpu_custom_call.1']
    %9 = vsyncpa [#allocation3], 0
    %s10 = scalar_lea.sflag [#allocation3], 1
    %11 = vsyncpa %s10, 0
    loop: start=0, step=1, limit=4
    $region2: #{tpu_custom_call.1} parent=1 // loop_pre_header
      _
    $region3: #{tpu_custom_call.1} parent=1 // loop_header
      %s13 = sphi 0, %s17
      %p14 = scmp.ge.s32.totalorder %s13, 4
      %s20 = sphi 0, %s32
      %s21 = sphi 0, %s28
      %s22 = sphi 0, %s20
      %s23 = sphi 0, %s21
      %s24 = sphi 0, %s22
      %s25 = sphi 0, %s23
      %s37 = sphi 0, %s39
      %s40 = sphi 0, %s37
      %s41 = sphi 0, %s40
      %s57 = sphi 0, %s41
      %s61 = sphi 0, %s61
      %s63 = sphi 0, %s61
      %s64 = sphi 0, %s63
      %s78 = sphi 0, %s64
      %s86 = sphi 0, %s88
      %s89 = sphi 0, %s86
      %s90 = sphi 0, %s89
      %s106 = sphi 0, %s90
      %s110 = sphi 0, %s110
      %s112 = sphi 0, %s110
      %s113 = sphi 0, %s112
      %s127 = sphi 0, %s113
      %s135 = sphi 0, %s137
      %s138 = sphi 0, %s135
      %s139 = sphi 0, %s138
      %s155 = sphi 0, %s139
    $region4: #{tpu_custom_call.1} parent=1 // loop_header_branch
      %16 = sbr.rel (%p14) target = $region8
    $region5: #{tpu_custom_call.1} parent=1 // loop_body
      %s18 = ssub.s32 %s13, 1
      %s19 = ssub.s32 %s13, 2
      %s26 = sadd.s32 1, %s21
      %p27 = scmp.ge.s32.totalorder %s26, 1
      %s28 = scalar_select %p27, 0, %s26
      %s29 = sadd.s32 1, %s20
      %s30 = scalar_select %p27, %s29, %s20
      %p31 = scmp.ge.s32.totalorder %s30, 2
      %s32 = scalar_select %p31, 0, %s30
      %s33 = ssub.s32 %s20, %s32
      %s34 = ssub.s32 %s21, %s28
      %s35 = sor.u32 %s33, %s34
      %p36 = scmp.eq.s32.totalorder %s35, 0
      %s38 = sadd.s32 %s37, 1
      %s39 = scalar_select %p36, %s37, %s38
      %p42 = pneg %p36
      %p43 = scmp.eq.s32.totalorder %s13, 1
      %p44 = por %p42, %p43
      %p45 = scmp.ne.s32.totalorder %s37, %s40
      %p46 = scmp.eq.s32.totalorder %s13, 0
      %p47 = por %p45, %p46
      %p48 = scmp.ne.s32.totalorder %s37, %s40
      %p49 = scmp.eq.s32.totalorder %s18, 1
      %p50 = por %p48, %p49
      %p51 = scmp.ne.s32.totalorder %s40, %s41
      %p52 = scmp.eq.s32.totalorder %s18, 0
      %p53 = por %p51, %p52
      %p54 = scmp.ne.s32.totalorder %s40, %s41
      %p55 = scmp.eq.s32.totalorder %s19, 1
      %p56 = por %p54, %p55
      %p58 = scmp.ne.s32.totalorder %s41, %s57
      %p59 = scmp.eq.s32.totalorder %s19, 0
      %p60 = por %p58, %p59
      %s62 = sadd.s32 %s61, 1
      %p65 = scmp.eq.s32.totalorder %s13, 1
      %p66 = scmp.ne.s32.totalorder %s61, %s63
      %p67 = scmp.eq.s32.totalorder %s13, 0
      %p68 = por %p66, %p67
      %p69 = scmp.ne.s32.totalorder %s61, %s63
      %p70 = scmp.eq.s32.totalorder %s18, 1
      %p71 = por %p69, %p70
      %p72 = scmp.ne.s32.totalorder %s63, %s64
      %p73 = scmp.eq.s32.totalorder %s18, 0
      %p74 = por %p72, %p73
      %p75 = scmp.ne.s32.totalorder %s63, %s64
      %p76 = scmp.eq.s32.totalorder %s19, 1
      %p77 = por %p75, %p76
      %p79 = scmp.ne.s32.totalorder %s64, %s78
      %p80 = scmp.eq.s32.totalorder %s19, 0
      %p81 = por %p79, %p80
      %s82 = ssub.s32 %s20, %s32
      %s83 = ssub.s32 %s21, %s28
      %s84 = sor.u32 %s82, %s83
      %p85 = scmp.eq.s32.totalorder %s84, 0
      %s87 = sadd.s32 %s86, 1
      %s88 = scalar_select %p85, %s86, %s87
      %p91 = pneg %p85
      %p92 = scmp.eq.s32.totalorder %s13, 1
      %p93 = por %p91, %p92
      %p94 = scmp.ne.s32.totalorder %s86, %s89
      %p95 = scmp.eq.s32.totalorder %s13, 0
      %p96 = por %p94, %p95
      %p97 = scmp.ne.s32.totalorder %s86, %s89
      %p98 = scmp.eq.s32.totalorder %s18, 1
      %p99 = por %p97, %p98
      %p100 = scmp.ne.s32.totalorder %s89, %s90
      %p101 = scmp.eq.s32.totalorder %s18, 0
      %p102 = por %p100, %p101
      %p103 = scmp.ne.s32.totalorder %s89, %s90
      %p104 = scmp.eq.s32.totalorder %s19, 1
      %p105 = por %p103, %p104
      %p107 = scmp.ne.s32.totalorder %s90, %s106
      %p108 = scmp.eq.s32.totalorder %s19, 0
      %p109 = por %p107, %p108
      %s111 = sadd.s32 %s110, 1
      %p114 = scmp.eq.s32.totalorder %s13, 1
      %p115 = scmp.ne.s32.totalorder %s110, %s112
      %p116 = scmp.eq.s32.totalorder %s13, 0
      %p117 = por %p115, %p116
      %p118 = scmp.ne.s32.totalorder %s110, %s112
      %p119 = scmp.eq.s32.totalorder %s18, 1
      %p120 = por %p118, %p119
      %p121 = scmp.ne.s32.totalorder %s112, %s113
      %p122 = scmp.eq.s32.totalorder %s18, 0
      %p123 = por %p121, %p122
      %p124 = scmp.ne.s32.totalorder %s112, %s113
      %p125 = scmp.eq.s32.totalorder %s19, 1
      %p126 = por %p124, %p125
      %p128 = scmp.ne.s32.totalorder %s113, %s127
      %p129 = scmp.eq.s32.totalorder %s19, 0
      %p130 = por %p128, %p129
      %s131 = ssub.s32 %s20, %s32
      %s132 = ssub.s32 %s21, %s28
      %s133 = sor.u32 %s131, %s132
      %p134 = scmp.eq.s32.totalorder %s133, 0
      %s136 = sadd.s32 %s135, 1
      %s137 = scalar_select %p134, %s135, %s136
      %p140 = pneg %p134
      %p141 = scmp.eq.s32.totalorder %s13, 1
      %p142 = por %p140, %p141
      %p143 = scmp.ne.s32.totalorder %s135, %s138
      %p144 = scmp.eq.s32.totalorder %s13, 0
      %p145 = por %p143, %p144
      %p146 = scmp.ne.s32.totalorder %s135, %s138
      %p147 = scmp.eq.s32.totalorder %s18, 1
      %p148 = por %p146, %p147
      %p149 = scmp.ne.s32.totalorder %s138, %s139
      %p150 = scmp.eq.s32.totalorder %s18, 0
      %p151 = por %p149, %p150
      %p152 = scmp.ne.s32.totalorder %s138, %s139
      %p153 = scmp.eq.s32.totalorder %s19, 1
      %p154 = por %p152, %p153
      %p156 = scmp.ne.s32.totalorder %s139, %s155
      %p157 = scmp.eq.s32.totalorder %s19, 0
      %p158 = por %p156, %p157
      %p159 = scmp.le.s32.totalorder 1, %s13
      %p160 = scmp.lt.s32.totalorder %s13, 3
      %p161 = pnand %p159, %p160
      %p162 = pneg %p161
      // Predicated region
      $region9: #{tpu_custom_call.1} parent=5 // pred_check
        _
      $region10: #{tpu_custom_call.1} parent=5 // pred_check_branch
        %164 = sbr.rel (%p161) target = $region12
      $region11: #{tpu_custom_call.1} parent=5 // pred_region
        %s165 = ssub.s32 %s13, 1
        // Predicated region
        $region13: #{tpu_custom_call.1} parent=11 // pred_check
          %p166 = pneg %p74
        $region14: #{tpu_custom_call.1} parent=11 // pred_check_branch
          %168 = sbr.rel (%p166) target = $region16
        $region15: #{tpu_custom_call.1} parent=11 // pred_region
          _
        $region16: #{tpu_custom_call.1} parent=11 // pred_fallthru
          _
        // Predicated region
        $region17: #{tpu_custom_call.1} parent=11 // pred_check
          %p169 = pneg %p123
        $region18: #{tpu_custom_call.1} parent=11 // pred_check_branch
          %171 = sbr.rel (%p169) target = $region20
        $region19: #{tpu_custom_call.1} parent=11 // pred_region
          _
        $region20: #{tpu_custom_call.1} parent=11 // pred_fallthru
          _
      $region12: #{tpu_custom_call.1} parent=5 // pred_fallthru
        _
      %p172 = scmp.lt.s32.totalorder %s13, 2
      // Predicated region
      $region21: #{tpu_custom_call.1} parent=5 // pred_check
        %p173 = pneg %p172
      $region22: #{tpu_custom_call.1} parent=5 // pred_check_branch
        %175 = sbr.rel (%p173) target = $region24
      $region23: #{tpu_custom_call.1} parent=5 // pred_region
        // Predicated region
        $region25: #{tpu_custom_call.1} parent=23 // pred_check
          %p176 = pneg %p47
        $region26: #{tpu_custom_call.1} parent=23 // pred_check_branch
          %178 = sbr.rel (%p176) target = $region28
        $region27: #{tpu_custom_call.1} parent=23 // pred_region
          %p179 = scmp.lt.s32.totalorder %s20, 1
          %s180 = scalar_select %p179, %s20, 1
          %p181 = scmp.lt.s32.totalorder %s21, 0
          %s182 = scalar_select %p181, %s21, 0
          %s183 = sadd.s32 %s182, %s180
          %s184 = smul.addr %s183, 8
          %s185 = scalar_lea.vmem %s0, %s184
        $region28: #{tpu_custom_call.1} parent=23 // pred_fallthru
          _
        // Predicated region
        $region29: #{tpu_custom_call.1} parent=23 // pred_check
          %p186 = pneg %p96
        $region30: #{tpu_custom_call.1} parent=23 // pred_check_branch
          %188 = sbr.rel (%p186) target = $region32
        $region31: #{tpu_custom_call.1} parent=23 // pred_region
          %p189 = scmp.lt.s32.totalorder %s20, 1
          %s190 = scalar_select %p189, %s20, 1
          %p191 = scmp.lt.s32.totalorder %s21, 0
          %s192 = scalar_select %p191, %s21, 0
          %s193 = sadd.s32 %s192, %s190
          %s194 = smul.addr %s193, 8
          %s195 = scalar_lea.vmem %s2, %s194
        $region32: #{tpu_custom_call.1} parent=23 // pred_fallthru
          _
      $region24: #{tpu_custom_call.1} parent=5 // pred_fallthru
        _
      %p196 = scmp.le.s32.totalorder 1, %s13
      %p197 = scmp.lt.s32.totalorder %s13, 3
      %p198 = pnand %p196, %p197
      %p199 = pneg %p198
      // Predicated region
      $region33: #{tpu_custom_call.1} parent=5 // pred_check
        _
      $region34: #{tpu_custom_call.1} parent=5 // pred_check_branch
        %201 = sbr.rel (%p198) target = $region36
      $region35: #{tpu_custom_call.1} parent=5 // pred_region
        %s202 = ssub.s32 %s13, 1
        %p203 = scmp.lt.s32.totalorder %s22, 1
        %s204 = scalar_select %p203, %s22, 1
        %p205 = scmp.lt.s32.totalorder %s23, 0
        %s206 = scalar_select %p205, %s23, 0
        %s207 = sadd.s32 %s206, %s204
        %s208 = smul.addr %s207, 8
        %s209 = scalar_lea.vmem %s0, %s208
        %p210 = pneg %p53
        %p211 = pneg %p50
        %p212 = pneg %p74
        %p213 = pneg %p71
        %p214 = scmp.lt.s32.totalorder %s22, 1
        %s215 = scalar_select %p214, %s22, 1
        %p216 = scmp.lt.s32.totalorder %s23, 0
        %s217 = scalar_select %p216, %s23, 0
        %s218 = sadd.s32 %s217, %s215
        %s219 = smul.addr %s218, 8
        %s220 = scalar_lea.vmem %s2, %s219
        %p221 = pneg %p102
        %p222 = pneg %p99
        %p223 = pneg %p123
        %p224 = pneg %p120
        %p225 = pneg %p151
        %p226 = pneg %p148
        %s227 = sand.u32 %s138, 1
        %s228 = scalar_lea.sflag [#allocation3], %s227
        %s229 = sand.u32 %s138, 1
        %s230 = smul.addr %s229, 8
        %s231 = scalar_lea.vmem [#allocation2], %s230
        %p232 = scmp.lt.s32.totalorder %s22, 1
        %s233 = scalar_select %p232, %s22, 1
        %p234 = scmp.lt.s32.totalorder %s23, 0
        %s235 = scalar_select %p234, %s23, 0
        %s236 = sadd.s32 %s235, %s233
        %s237 = smul.addr %s236, 8
        %s238 = scalar_lea.vmem %s0, %s237
        %p239 = scmp.lt.s32.totalorder %s22, 1
        %s240 = scalar_select %p239, %s22, 1
        %p241 = scmp.lt.s32.totalorder %s23, 0
        %s242 = scalar_select %p241, %s23, 0
        %s243 = sadd.s32 %s242, %s240
        %s244 = smul.addr %s243, 8
        %s245 = scalar_lea.vmem %s2, %s244
        %v247 = vld [vmem:[%s238] sm:$0xff]
        %v248 = vld [vmem:[%s1] sm:$0xff]
        %v249 = vld [vmem:[%s1 + $0x8] sm:$0xff]
        %v250 = vld [vmem:[%s1 + $0x10] sm:$0xff]
        %v251 = vld [vmem:[%s1 + $0x18] sm:$0xff]
        %v252 = vld [vmem:[%s3] sm:$0x3]
        %vm253 = vcmask 261120
        %v255 = vsel %vm253, %v247, 0
        %257 = vmatprep.subr.mxu0 0.0
        %258 = vmatpush1.msra.mxu0 0.0
        %259 = vmatprep.subr.mxu0 0.0
        %260 = vmatpush1.msra.mxu0 0.0
        %261 = vmatprep.subr.mxu0 0.0
        %262 = vmatpush1.msra.mxu0 0.0
        %263 = vmatprep.subr.mxu0 0.0
        %264 = vmatpush1.msra.mxu0 0.0
        %265 = vmatprep.subr.mxu0 0.0
        %266 = vmatpush1.msra.mxu0 0.0
        %267 = vmatprep.subr.mxu0 0.0
        %268 = vmatpush1.msra.mxu0 0.0
        %269 = vmatprep.subr.mxu0 0.0
        %270 = vmatpush1.msra.mxu0 0.0
        %271 = vmatprep.subr.mxu0 0.0
        %272 = vmatpush1.msra.mxu0 0.0
        %273 = vmatprep.subr.mxu0 0.0
        %274 = vmatpush1.msra.mxu0 0.0
        %275 = vmatprep.subr.mxu0 0.0
        %276 = vmatpush1.msra.mxu0 0.0
        %277 = vmatprep.subr.mxu0 0.0
        %278 = vmatpush1.msra.mxu0 0.0
        %279 = vmatprep.subr.mxu0 0.0
        %280 = vmatpush1.msra.mxu0 0.0
        %281 = vmatprep.subr.mxu0 0.0
        %282 = vmatpush1.msra.mxu0 %v251
        %283 = vmatprep.subr.mxu0 0.0
        %284 = vmatpush1.msra.mxu0 %v250
        %285 = vmatprep.subr.mxu0 0.0
        %286 = vmatpush1.msra.mxu0 %v249
        %287 = vmatprep.subr.mxu0 0.0
        %288 = vmatpush1.msra.mxu0 %v248
        %289 = vmatprep.subr.mxu0 0.0
        %290 = vmatpush2.msra.mxu0 0.0
        %291 = vmatprep.subr.mxu0 0.0
        %292 = vmatpush2.msra.mxu0 0.0
        %293 = vmatprep.subr.mxu0 0.0
        %294 = vmatpush2.msra.mxu0 0.0
        %295 = vmatprep.subr.mxu0 0.0
        %296 = vmatpush2.msra.mxu0 0.0
        %297 = vmatprep.subr.mxu0 0.0
        %298 = vmatpush2.msra.mxu0 0.0
        %299 = vmatprep.subr.mxu0 0.0
        %300 = vmatpush2.msra.mxu0 0.0
        %301 = vmatprep.subr.mxu0 0.0
        %302 = vmatpush2.msra.mxu0 0.0
        %303 = vmatprep.subr.mxu0 0.0
        %304 = vmatpush2.msra.mxu0 0.0
        %305 = vmatprep.subr.mxu0 0.0
        %306 = vmatpush2.msra.mxu0 0.0
        %307 = vmatprep.subr.mxu0 0.0
        %308 = vmatpush2.msra.mxu0 0.0
        %309 = vmatprep.subr.mxu0 0.0
        %310 = vmatpush2.msra.mxu0 0.0
        %311 = vmatprep.subr.mxu0 0.0
        %312 = vmatpush2.msra.mxu0 0.0
        %313 = vmatprep.subr.mxu0 0.0
        %314 = vmatpush2.msra.mxu0 0.0
        %315 = vmatprep.subr.mxu0 0.0
        %316 = vmatpush2.msra.mxu0 0.0
        %317 = vmatprep.subr.mxu0 0.0
        %318 = vmatpush2.msra.mxu0 0.0
        %319 = vmatprep.subr.mxu0 0.0
        %320 = vmatpush2.msra.mxu0 0.0
        %321 = vmatprep.mubr.f32.mxu0 0.0
        %322 = vmatmul.mubr.f32.gmra.mxu0 %v255
        %v323 = vpop.f32.mrf.mxu0
        %v324 = vadd.f32 0.0, %v323
        %v325 = vpop.f32.mrf.mxu0
        %326 = vdwg.mxu0
        %vm327 = vcmask 31744
        %v328 = vsel %vm327, %v324, -inf
        %329 = vmax.xlane.f32.xlu0 %v328
        %v330 = vpop.xlane.xlu0 %329
        %v331 = vsub.f32 %v324, %v330
        %v332 = vmul.f32 %v331, 1.442695
        %v333 = vpow.pop %v332
        %v334 = vsel %vm327, %v333, 0.0
        %335 = vadd.xlane.f32.xlu0 %v334
        %v336 = vpop.xlane.xlu0 %335
        %v337 = vrcp.pop %v336
        %v338 = vmul.f32 %v333, %v337
        %v339 = vlog2.pop %v336
        %v340 = vmul.f32 %v339, 0.6931472
        %v341 = vadd.f32 %v330, %v340
        %v342 = vsel %vm327, %v338, -inf
        %343 = vmax.xlane.f32.xlu0 %v342
        %v344 = vpop.xlane.xlu0 %343
        %vm345 = vcmp.eq.f32.partialorder %v338, %v344
        %v346 = vsel %vm345, 1, 0
        %v347 = vcvt.s32.f32 %v346
        %v348 = vpack.c.bf16 %v347, %v347
        %v350 = vsel %vm327, %v348, 0
        %vm352 = vcmask 1041408
        %v354 = vsel %vm352, %v252, 0
        %356 = vmatprep.subr.bf16.mxu0 0
        %357 = vmatpush1.bf16.msra.mxu0 0
        %358 = vmatprep.subr.bf16.mxu0 0
        %359 = vmatpush1.bf16.msra.mxu0 0
        %360 = vmatprep.subr.bf16.mxu0 0
        %361 = vmatpush1.bf16.msra.mxu0 0
        %362 = vmatprep.subr.bf16.mxu0 0
        %363 = vmatpush1.bf16.msra.mxu0 0
        %364 = vmatprep.subr.bf16.mxu0 0
        %365 = vmatpush1.bf16.msra.mxu0 0
        %366 = vmatprep.subr.bf16.mxu0 0
        %367 = vmatpush1.bf16.msra.mxu0 0
        %368 = vmatprep.subr.bf16.mxu0 0
        %369 = vmatpush1.bf16.msra.mxu0 0
        %370 = vmatprep.subr.bf16.mxu0 0
        %371 = vmatpush1.bf16.msra.mxu0 %v354
        %372 = vmatprep.subr.bf16.mxu0 0
        %373 = vmatpush2.bf16.msra.mxu0 0
        %374 = vmatprep.subr.bf16.mxu0 0
        %375 = vmatpush2.bf16.msra.mxu0 0
        %376 = vmatprep.subr.bf16.mxu0 0
        %377 = vmatpush2.bf16.msra.mxu0 0
        %378 = vmatprep.subr.bf16.mxu0 0
        %379 = vmatpush2.bf16.msra.mxu0 0
        %380 = vmatprep.subr.bf16.mxu0 0
        %381 = vmatpush2.bf16.msra.mxu0 0
        %382 = vmatprep.subr.bf16.mxu0 0
        %383 = vmatpush2.bf16.msra.mxu0 0
        %384 = vmatprep.subr.bf16.mxu0 0
        %385 = vmatpush2.bf16.msra.mxu0 0
        %386 = vmatprep.subr.bf16.mxu0 0
        %387 = vmatpush2.bf16.msra.mxu0 0
        %388 = vmatprep.mubr.bf16.mxu0 0
        %389 = vmatmul.mubr.bf16.gmra.mxu0 %v350
        %v390 = vpop.f32.mrf.mxu0
        %v391 = vadd.f32 0.0, %v390
        %v392 = vpop.f32.mrf.mxu0
        %v393 = vpop.f32.mrf.mxu0
        %v394 = vpop.f32.mrf.mxu0
        %395 = vdwg.mxu0
        %vm396 = vcmp.eq.f32.partialorder %v391, 1.0
        %v397 = vsel %vm396, 1, 0
        %v398 = vcvt.s32.f32 %v397
        %v399 = vmul.f32 %v347, %v398
        %v400 = vmul.f32 %v338, %v399
        %v401 = vsel %vm327, %v400, 0.0
        %402 = vadd.xlane.f32.xlu0 %v401
        %v403 = vpop.xlane.xlu0 %402
        %v404 = vmul.f32 %v399, 2.0
        %v405 = vsub.f32 %v338, %v404
        %v406 = vsel %vm327, %v405, -inf
        %407 = vmax.xlane.f32.xlu0 %v406
        %v408 = vpop.xlane.xlu0 %407
        %vm409 = vcmp.eq.f32.partialorder %v405, %v408
        %v410 = vsel %vm409, 1, 0
        %v411 = vcvt.s32.f32 %v410
        %v412 = vpack.c.bf16 %v411, %v411
        %v414 = vsel %vm327, %v412, 0
        %416 = vmatprep.subr.bf16.mxu0 0
        %417 = vmatpush1.bf16.msra.mxu0 0
        %418 = vmatprep.subr.bf16.mxu0 0
        %419 = vmatpush1.bf16.msra.mxu0 0
        %420 = vmatprep.subr.bf16.mxu0 0
        %421 = vmatpush1.bf16.msra.mxu0 0
        %422 = vmatprep.subr.bf16.mxu0 0
        %423 = vmatpush1.bf16.msra.mxu0 0
        %424 = vmatprep.subr.bf16.mxu0 0
        %425 = vmatpush1.bf16.msra.mxu0 0
        %426 = vmatprep.subr.bf16.mxu0 0
        %427 = vmatpush1.bf16.msra.mxu0 0
        %428 = vmatprep.subr.bf16.mxu0 0
        %429 = vmatpush1.bf16.msra.mxu0 0
        %430 = vmatprep.subr.bf16.mxu0 0
        %431 = vmatpush1.bf16.msra.mxu0 %v354
        %432 = vmatprep.subr.bf16.mxu0 0
        %433 = vmatpush2.bf16.msra.mxu0 0
        %434 = vmatprep.subr.bf16.mxu0 0
        %435 = vmatpush2.bf16.msra.mxu0 0
        %436 = vmatprep.subr.bf16.mxu0 0
        %437 = vmatpush2.bf16.msra.mxu0 0
        %438 = vmatprep.subr.bf16.mxu0 0
        %439 = vmatpush2.bf16.msra.mxu0 0
        %440 = vmatprep.subr.bf16.mxu0 0
        %441 = vmatpush2.bf16.msra.mxu0 0
        %442 = vmatprep.subr.bf16.mxu0 0
        %443 = vmatpush2.bf16.msra.mxu0 0
        %444 = vmatprep.subr.bf16.mxu0 0
        %445 = vmatpush2.bf16.msra.mxu0 0
        %446 = vmatprep.subr.bf16.mxu0 0
        %447 = vmatpush2.bf16.msra.mxu0 0
        %448 = vmatprep.mubr.bf16.mxu0 0
        %449 = vmatmul.mubr.bf16.gmra.mxu0 %v414
        %v450 = vpop.f32.mrf.mxu0
        %v451 = vadd.f32 0.0, %v450
        %v452 = vpop.f32.mrf.mxu0
        %v453 = vpop.f32.mrf.mxu0
        %v454 = vpop.f32.mrf.mxu0
        %455 = vdwg.mxu0
        %vm456 = vcmp.eq.f32.partialorder %v451, 1.0
        %v457 = vsel %vm456, 1, 0
        %v458 = vcvt.s32.f32 %v457
        %v459 = vmul.f32 %v411, %v458
        %v460 = vmul.f32 %v338, %v459
        %v461 = vsel %vm327, %v460, 0.0
        %462 = vadd.xlane.f32.xlu0 %v461
        %v463 = vpop.xlane.xlu0 %462
        %v464 = vadd.f32 %v403, %v463
        %v465 = vmax.f32 %v464, 1e-09
        %v466 = vld [vmem:[%s245] sm:$0xff]
        %v467 = vrcp.pop %v465
        %v468 = vmul.f32 %v403, %v467
        %v469 = vmul.f32 %v468, %v399
        %470 = vst.msk [vmem:[%s231] sm:$0xff] %vm327, %v469
        %v471 = vmul.f32 %v463, %v467
        %v472 = vrcp.pop 0.2
        %v473 = vmul.f32 %v471, %v472
        %vm474 = vcmp.lt.f32.partialorder %v466, %v473
        %v475 = vsel %vm474, 1, 0
        %v476 = vcvt.s32.f32 %v475
        %478 = vset.pattern.permute.xlu0 1
        %479 = vperm.xlu0 %478, %v476
        %v480 = vpop.permute.xlu0 %479
        %v482 = vmul.f32 %v459, %v480
        %v483 = vmul.f32 %v471, %v482
        %485 = vrot.lane.b32.xlu0 %v483, 4
        %v486 = vpop.permute.xlu0 %485
        %vm488 = vcmask 64544
        %489 = vst.msk [vmem:[%s231] sm:$0xff] %vm488, %v486
        %491 = vrot.lane.b32.xlu0 %v338, 8
        %v492 = vpop.permute.xlu0 %491
        %vm494 = vcmask 97344
        %495 = vst.msk [vmem:[%s231] sm:$0xff] %vm494, %v492
        %v496 = vmul.f32 %v341, %v341
        %vm497 = vcmask 105568
        %498 = vst.msk [vmem:[%s231] sm:$0xff] %vm497, %v496
        %s499 = sand.u32 %s138, 1
        %s500 = scalar_lea.sflag [#allocation3], %s499
        %s501 = sand.u32 %s138, 1
        %s502 = smul.addr %s501, 8
        %s503 = scalar_lea.vmem [#allocation2], %s502
        // Predicated region
        $region37: #{tpu_custom_call.1} parent=35 // pred_check
          %p504 = pneg %p148
        $region38: #{tpu_custom_call.1} parent=35 // pred_check_branch
          %506 = sbr.rel (%p504) target = $region40
        $region39: #{tpu_custom_call.1} parent=35 // pred_region
          %s508 = ssub.s32 128, 128
          %509 = vsyncadd %s500, %s508
          %s510 = sadd.s32 %s23, %s22
          %s511 = smul.addr %s510, 128
          %s512 = scalar_lea.hbm %s4, %s511
          %s514 = sshll.u32 %s503, 4
          %s515 = int_to_ptr.vmem [resolvable:$true] %s514
          %517 = dma.vmem_to_hbm [thread:$0]  %s515, 128, %s512, %s500
        $region40: #{tpu_custom_call.1} parent=35 // pred_fallthru
          _
      $region36: #{tpu_custom_call.1} parent=5 // pred_fallthru
        _
      %p518 = scmp.le.s32.totalorder 2, %s13
      // Predicated region
      $region41: #{tpu_custom_call.1} parent=5 // pred_check
        %p519 = pneg %p518
      $region42: #{tpu_custom_call.1} parent=5 // pred_check_branch
        %521 = sbr.rel (%p519) target = $region44
      $region43: #{tpu_custom_call.1} parent=5 // pred_region
        %s522 = ssub.s32 %s13, 2
        // Predicated region
        $region45: #{tpu_custom_call.1} parent=43 // pred_check
          %p523 = pneg %p154
        $region46: #{tpu_custom_call.1} parent=43 // pred_check_branch
          %525 = sbr.rel (%p523) target = $region48
        $region47: #{tpu_custom_call.1} parent=43 // pred_region
          %s526 = sand.u32 %s139, 1
          %s527 = scalar_lea.sflag [#allocation3], %s526
          %s528 = sand.u32 %s139, 1
          %s529 = smul.addr %s528, 8
          %s530 = scalar_lea.vmem [#allocation2], %s529
          %531 = dma.done %s527, 128
        $region48: #{tpu_custom_call.1} parent=43 // pred_fallthru
          _
      $region44: #{tpu_custom_call.1} parent=5 // pred_fallthru
        _
    $region6: #{tpu_custom_call.1} parent=1 // loop_footer
      %s17 = sadd.s32 1, %s13
    $region7: #{tpu_custom_call.1} parent=1 // loop_footer_branch
      %12 = sbr.rel target = $region3
    $region8: #{tpu_custom_call.1} parent=1 // loop_exit
      _
    %532 = vsyncpa [#allocation3], 1
    %s533 = scalar_lea.sflag [#allocation3], 1
    %534 = vsyncpa %s533, 1

</llo_original>
